<compile_context>
chip_gen: v7x
topology: tpu7x:2x2x1
jax: 0.10.0
libtpu: 0.0.40
codegen_flags: <defaults>
</compile_context>

<pallas_src>
import numpy as np
import jax
import jax.numpy as jnp
from jax.experimental import pallas as pl
from jax.experimental.pallas import tpu as pltpu


def _copy_kernel(x_ref, o_ref):
    # Straight tile copy: the flattened data order is already correct; this
    # kernel just materializes it block-by-block (lane/sublane-dense tiles).
    o_ref[...] = x_ref[...]


@jax.jit
def flatten(x):
    """Pallas equivalent of torch Flatten: (B, ...) -> (B, prod(...))."""
    B = x.shape[0]
    F = int(np.prod(x.shape[1:])) if x.ndim > 1 else 1
    N = B * F
    itemsize = int(np.dtype(x.dtype).itemsize)

    # --- metadata-only flatten to 1-D (row-major, matches torch .view on a
    #     contiguous NCHW tensor).
    x_flat = x.reshape(-1)

    # --- pick a lane/sublane-dense slab layout (R, L): L multiple of 128,
    #     R multiple of 8, so every block is full vregs and unmasked stores.
    L = None
    for cand in (1024, 512, 256, 128):
        if N % (cand * 8) == 0:
            L = cand
            break
    if L is None:
        # Not (8*128)-aligned: pad to an aligned slab and trim afterwards
        # (keeps the kernel pipelined instead of one giant un-pipelined block).
        L = 128
        n_pad = pl.cdiv(N, L * 8) * (L * 8)
        x_flat = jnp.pad(x_flat, (0, n_pad - N))
    else:
        n_pad = N
    R = n_pad // L
    x_slab = x_flat.reshape(R, L)

    # --- block rows: target ~2 MiB per block. With input+output each
    #     double-buffered that's ~8 MiB of VMEM, safe on v5e (16 MiB scoped),
    #     v6e (32 MiB scoped) and v7x (32 MiB scoped / 64 MiB physical).
    target_block_bytes = 2 * 1024 * 1024
    tr = max(8, (target_block_bytes // (L * itemsize)) // 8 * 8)
    tr = min(tr, R)
    # Prefer >= 2 grid steps so the "parallel" axis can shard across v7x's 2 TCs.
    if R > 8 and pl.cdiv(R, tr) < 2:
        tr = max(8, (R // 2) // 8 * 8)
    grid = (pl.cdiv(R, tr),)

    block_bytes = tr * L * itemsize
    vmem_limit = int(max(32 * 1024 * 1024, 6 * block_bytes))

    out_slab = pl.pallas_call(
        _copy_kernel,
        out_shape=jax.ShapeDtypeStruct((R, L), x.dtype),
        grid=grid,
        in_specs=[pl.BlockSpec((tr, L), lambda i: (i, 0))],
        out_specs=pl.BlockSpec((tr, L), lambda i: (i, 0)),
        compiler_params=pltpu.CompilerParams(
            dimension_semantics=("parallel",),
            vmem_limit_bytes=vmem_limit,
        ),
        cost_estimate=pl.CostEstimate(
            flops=0,
            transcendentals=0,
            bytes_accessed=2 * n_pad * itemsize,
        ),
    )(x_slab)

    # --- metadata glue back to (B, F), trimming any alignment padding.
    out_flat = out_slab.reshape(-1)
    if n_pad != N:
        out_flat = out_flat[:N]
    return out_flat.reshape(B, F)


if __name__ == "__main__":
    key = jax.random.PRNGKey(0)

    # Small NCHW input consistent with an encoder feature map: B=2, C=4, 16x16.
    x = jax.random.normal(key, (2, 4, 16, 16), dtype=jnp.float32)

    y = flatten(x)
    y = jax.block_until_ready(y)

    # Reference: exact semantics of torch's x.view(x.size(0), -1).
    y_ref = x.reshape(x.shape[0], -1)
    assert y.shape == (2, 4 * 16 * 16), y.shape
    assert y.dtype == x.dtype
    np.testing.assert_array_equal(np.asarray(y), np.asarray(y_ref))

    # Extra robustness check: non-(8*128)-aligned element count (padded path).
    x2 = jax.random.normal(jax.random.PRNGKey(1), (2, 3, 5, 7), dtype=jnp.float32)
    y2 = jax.block_until_ready(flatten(x2))
    np.testing.assert_array_equal(np.asarray(y2), np.asarray(x2.reshape(2, -1)))

    print("KERNEL_OK")
</pallas_src>

<mosaic_0001>
module attributes {stable_mosaic.version = 11 : i64} {
  func.func @_copy_kernel(%arg0: i32, %arg1: memref<8x256xf32, #tpu.memory_space<vmem>>, %arg2: memref<8x256xf32, #tpu.memory_space<vmem>>) attributes {dimension_semantics = [#tpu.dimension_semantics<parallel>], iteration_bounds = array<i64: 1>, scalar_prefetch = 0 : i64, scratch_operands = 0 : i64, tpu.core_type = #tpu.core_type<tc>, window_params = [{transform_indices = @transform_0, window_bounds = array<i64: 8, 256>}, {transform_indices = @transform_1, window_bounds = array<i64: 8, 256>}]} {
    %c0 = arith.constant 0 : index
    %c0_0 = arith.constant 0 : index
    %0 = vector.load %arg1[%c0, %c0_0] : memref<8x256xf32, #tpu.memory_space<vmem>>, vector<8x256xf32>
    %c0_1 = arith.constant 0 : index
    %c0_2 = arith.constant 0 : index
    %1 = vector.load %arg2[%c0_1, %c0_2] : memref<8x256xf32, #tpu.memory_space<vmem>>, vector<8x256xf32>
    tpu.vector_store %arg2[%c0_1, %c0_2], %0 {strides = array<i32>} : memref<8x256xf32, #tpu.memory_space<vmem>>, vector<8x256xf32>,
    return
  }
  func.func @transform_0(%arg0: i32) -> (i32, i32) {
    %c0_i32 = arith.constant 0 : i32
    %c0_i32_0 = arith.constant 0 : i32
    return %arg0, %c0_i32 : i32, i32
  }
  func.func @transform_1(%arg0: i32) -> (i32, i32) {
    %c0_i32 = arith.constant 0 : i32
    %c0_i32_0 = arith.constant 0 : i32
    return %arg0, %c0_i32 : i32, i32
  }
}

</mosaic_0001>

<llo_original>
// kernel: flatten.1
$region0: #{flatten.1}
  #allocation0 [shape = 'u32[]', space=smem, size = 0x4, offset = 0x4, fixed_abs, tag = 'smem constant byte address 0x4 - core index']
  #allocation1 [shape = 'u32[144,128]{1,0:T(1,128)}', space=vmem, size = 0x12000, scoped, tag = 'internal scratch']
  %s0 = inlined_call_operand.vmem [shape: f32[8,256], index: 0, kind: input, shape index: {}]
  %s1 = inlined_call_operand.vmem [shape: f32[8,256], index: 1, kind: output, shape index: {}]
  %s2 = sld [smem:[#allocation0]]
  $region14: #{flatten.1} parent=0
    _
  %s4 = ssub.s32 1, %s2
  %s5 = scalar_select 0, %s4, %s2
  // Predicated region
  $region2: #{flatten.1} parent=0 // pred_check
    _
  $region3: #{flatten.1} parent=0 // pred_check_branch
    %7 = sbr.rel (0) target = $region5
  $region4: #{flatten.1} parent=0 // pred_region
    _
  $region5: #{flatten.1} parent=0 // pred_fallthru
    _
  %v8 = vld [vmem:[%s0] sm:$0xff]
  %v9 = vld [vmem:[%s0 + $0x8] sm:$0xff]
  %10 = vst [vmem:[%s1] sm:$0xff] %v8
  %11 = vst [vmem:[%s1 + $0x8] sm:$0xff] %v9
  // Predicated region
  $region6: #{flatten.1} parent=0 // pred_check
    _
  $region7: #{flatten.1} parent=0 // pred_check_branch
    %13 = sbr.rel (0) target = $region9
  $region8: #{flatten.1} parent=0 // pred_region
    _
  $region9: #{flatten.1} parent=0 // pred_fallthru
    _
  // Predicated region
  $region10: #{flatten.1} parent=0 // pred_check
    _
  $region11: #{flatten.1} parent=0 // pred_check_branch
    %15 = sbr.rel (0) target = $region13
  $region12: #{flatten.1} parent=0 // pred_region
    _
  $region13: #{flatten.1} parent=0 // pred_fallthru
    _

</llo_original>
